<compile_context>
chip_gen: v6e
topology: v6e:2x2x1
jax: 0.10.0
libtpu: 0.0.40
codegen_flags: <defaults>
</compile_context>

<pallas_src>
import functools

import numpy as np
import jax
import jax.numpy as jnp
from jax.experimental import pallas as pl
from jax.experimental.pallas import tpu as pltpu


def _btv_taps_by_m(win_size: int, decay: float):
    """Taps (m, n) of the BTV stencil (i != j), grouped m-outermost, then by weight."""
    assert win_size % 2 == 1
    c = win_size // 2
    by_m = {}
    for i in range(win_size):
        for j in range(win_size):
            if i != j:                     # note: i != j, NOT (m, n) != (0, 0)
                m, n = i - c, j - c
                w = float(decay ** (abs(m) + abs(n)))
                by_m.setdefault(m, {}).setdefault(w, []).append(n)
    out = []
    for m in sorted(by_m):
        groups = tuple(sorted(((w, tuple(sorted(ns))) for w, ns in by_m[m].items()),
                              reverse=True))
        out.append((m, groups))
    return tuple(out)


def _wbtv_kernel(s_ref, top_ref, bot_ref, w_ref, out_ref, *, taps_by_m):
    i = pl.program_id(0)
    n_tiles = pl.num_programs(0)
    TH, W = s_ref.shape
    n_ext = TH + 16

    s = s_ref[...]
    # Halos are clamped at the image edges by their index_maps; zero them there so row
    # shifts past the image reproduce the conv's zero padding.
    top = top_ref[...] * (i > 0).astype(jnp.float32)
    bot = bot_ref[...] * (i < n_tiles - 1).astype(jnp.float32)
    s_ext = jnp.concatenate([top, s, bot], axis=0)            # (TH + 16, W)

    lane = jax.lax.broadcasted_iota(jnp.int32, (TH, W), 1)

    acc = jnp.zeros((TH, W), jnp.float32)
    for m, n_groups in taps_by_m:
        # Row-shifted view: sm[r, c] = S[r + m, c] (neighbour-tile rows / zero padding).
        if m == 0:
            sm = s
        else:
            sm = pltpu.roll(s_ext, (-m) % n_ext, axis=0)[8:8 + TH, :]
        for wk, ns in n_groups:        # taps of this m sharing the weight decay^(|m|+|n|)
            g = None
            for n in ns:
                if n == 0:
                    t = jnp.abs(sm - s)
                else:
                    # shifted[r, c] = S[r + m, c + n] if 0 <= c + n < W else 0.
                    valid = (lane < (W - n)) if n > 0 else (lane >= (-n))
                    shifted = jnp.where(valid, pltpu.roll(sm, (-n) % W, axis=1), 0.0)
                    t = jnp.abs(shifted - s)
                g = t if g is None else g + t
            acc = acc + jnp.float32(wk) * g

    # Weighted partial sum, folded layout-preservingly into one lane-dense (8, 128) block:
    # sublane-block fold over the free (TH//8, 8, W) view, then lane-block fold.
    p = acc * w_ref[...]
    p8 = jnp.sum(p.reshape(TH // 8, 8, W), axis=0)            # (8, W)
    blk = p8[:, 0:128]
    for cb in range(1, W // 128):
        blk = blk + p8[:, cb * 128:(cb + 1) * 128]
    out_ref[...] = blk.reshape(1, 8, 128)


def _vmem_capacity_bytes(default=64 << 20):
    try:
        info = pltpu.get_tpu_info()
        cap = int(getattr(info, "vmem_capacity_bytes", default))
        return cap if cap > 0 else default
    except Exception:
        return default


def _choose_row_tile(h_pad, w_pad, budget_bytes):
    def est(th):
        blk = 2 * (th + 2 * 8) * w_pad * 4        # S tile + two 8-row halos, double-buffered
        blk += 2 * th * w_pad * 4                 # weights tile, double-buffered
        blk += 2 * 8 * 128 * 4                    # lane-dense output block
        tmp = 10 * (th + 16) * w_pad * 4          # live f32 temporaries (streamed taps)
        return blk + tmp

    # Keep >= 2 tiles whenever possible so the "parallel" grid axis can feed both
    # TensorCores on v7x; prefer an even tile count.
    max_th = h_pad if h_pad < 16 else (h_pad // 2)
    cands = [t for t in range(8, h_pad + 1, 8)
             if h_pad % t == 0 and t <= max_th and est(t) <= budget_bytes]
    if not cands:
        return 8, est
    even = [t for t in cands if (h_pad // t) % 2 == 0]
    return (max(even) if even else max(cands)), est


def _round_up(v, m):
    return ((v + m - 1) // m) * m


def weighted_btv_forward(x, weights, *, win_size: int, decay: float = 0.7,
                         row_tile=None, vmem_budget_bytes=None):
    """Pallas implementation of WeightedBTV.forward for x of shape (C, H, W)."""
    C, H, W = x.shape
    assert weights.shape in ((1, H, W), (H, W))
    pad = win_size // 2
    assert win_size % 2 == 1 and 1 <= pad <= 8

    H_pad = _round_up(max(H, 8), 8)
    W_pad = _round_up(max(W, 128), 128)

    # Wrapper-side precompute: f32 channel sum (the only thing the math needs) and f32
    # weights, zero-padded to aligned sizes (zero weights => padded cells don't count).
    s = jnp.sum(x.astype(jnp.float32), axis=0)                     # (H, W)
    w2 = jnp.reshape(weights, (H, W)).astype(jnp.float32)
    if (H_pad, W_pad) != (H, W):
        s = jnp.pad(s, ((0, H_pad - H), (0, W_pad - W)))
        w2 = jnp.pad(w2, ((0, H_pad - H), (0, W_pad - W)))

    vmem_cap = _vmem_capacity_bytes()
    budget = (vmem_budget_bytes if vmem_budget_bytes is not None
              else max(min(vmem_cap - (8 << 20), 96 << 20), 16 << 20))

    auto_tile, est = _choose_row_tile(H_pad, W_pad, budget)
    TH = row_tile if row_tile is not None else auto_tile
    assert H_pad % TH == 0 and TH % 8 == 0
    n_tiles = H_pad // TH
    thb, hb = TH // 8, H_pad // 8

    kernel = functools.partial(_wbtv_kernel, taps_by_m=_btv_taps_by_m(win_size, decay))
    vmem_limit = int(min(max(est(TH) + (4 << 20), 16 << 20),
                         max(vmem_cap - (8 << 20), 16 << 20)))

    partials = pl.pallas_call(
        kernel,
        out_shape=jax.ShapeDtypeStruct((n_tiles, 8, 128), jnp.float32),
        grid=(n_tiles,),
        in_specs=[
            pl.BlockSpec((TH, W_pad), lambda i: (i, 0)),                                  # S tile
            pl.BlockSpec((8, W_pad), lambda i: (jnp.maximum(i * thb - 1, 0), 0)),         # halo above
            pl.BlockSpec((8, W_pad), lambda i: (jnp.minimum((i + 1) * thb, hb - 1), 0)),  # halo below
            pl.BlockSpec((TH, W_pad), lambda i: (i, 0)),                                  # weights tile
        ],
        out_specs=pl.BlockSpec((1, 8, 128), lambda i: (i, 0, 0)),
        compiler_params=pltpu.CompilerParams(
            dimension_semantics=("parallel",),
            vmem_limit_bytes=vmem_limit,
        ),
    )(s, s, s, w2)

    return jnp.sum(partials) / jnp.float32(H * W)


def _reference_forward(x, weights, *, win_size: int, channels: int, decay: float = 0.7):
    """Pure-JAX replica of the PyTorch module (conv2d formulation), for checking."""
    c = win_size // 2
    ks = []
    for i in range(win_size):
        for j in range(win_size):
            if i != j:
                k = np.zeros((win_size, win_size), np.float32)
                k[i, j] = 1.0
                k[c, c] = -1.0
                k *= decay ** (abs(i - c) + abs(j - c))
                ks.append(k)
    kernels = np.repeat(np.stack(ks)[:, None, :, :], channels, axis=1)  # (K, C, ws, ws)
    x4 = x[None].astype(jnp.float32)
    out = jax.lax.conv_general_dilated(
        x4, jnp.asarray(kernels), window_strides=(1, 1),
        padding=[(c, c), (c, c)],
        dimension_numbers=("NCHW", "OIHW", "NCHW"),
        precision=jax.lax.Precision.HIGHEST)
    prior = jnp.sum(jnp.abs(out), axis=1)                               # (1, H, W)
    return jnp.mean(prior * weights)


if __name__ == "__main__":
    key = jax.random.PRNGKey(0)
    kx, kw = jax.random.split(key)

    configs = [
        # (C, H,   W,  win_size, row_tile, x_dtype)
        (4, 32, 128, 3, 16,   jnp.float32),   # two row tiles, pad=1 halos
        (4, 32, 128, 5, 8,    jnp.float32),   # four row tiles, pad=2 halos
        (4, 16, 128, 3, None, jnp.float32),   # auto tile -> 2 tiles (megacore-friendly)
        (3, 24, 200, 3, None, jnp.float32),   # W padded 200 -> 256, 3 tiles
        (4, 16, 128, 5, None, jnp.bfloat16),  # bf16 input; f32 channel sum in wrapper
    ]
    for C, H, W, ws, rt, dt in configs:
        x = jax.random.normal(kx, (C, H, W), dtype=jnp.float32).astype(dt)
        weights = jax.random.uniform(kw, (1, H, W), dtype=jnp.float32,
                                     minval=0.5, maxval=1.5)

        out = jax.block_until_ready(
            weighted_btv_forward(x, weights, win_size=ws, decay=0.7, row_tile=rt))
        ref = jax.block_until_ready(
            _reference_forward(x, weights, win_size=ws, channels=C, decay=0.7))

        assert np.allclose(np.asarray(out), np.asarray(ref), rtol=1e-4, atol=1e-5), (
            C, H, W, ws, rt, str(dt), float(out), float(ref))

    print("KERNEL_OK")
</pallas_src>

<mosaic_0001>
module attributes {stable_mosaic.version = 11 : i64} {
  func.func @_wbtv_kernel(%arg0: i32, %arg1: memref<16x128xf32, #tpu.memory_space<vmem>>, %arg2: memref<8x128xf32, #tpu.memory_space<vmem>>, %arg3: memref<8x128xf32, #tpu.memory_space<vmem>>, %arg4: memref<16x128xf32, #tpu.memory_space<vmem>>, %arg5: memref<1x8x128xf32, #tpu.memory_space<vmem>>) attributes {dimension_semantics = [#tpu.dimension_semantics<parallel>], iteration_bounds = array<i64: 2>, scalar_prefetch = 0 : i64, scratch_operands = 0 : i64, tpu.core_type = #tpu.core_type<tc>, window_params = [{transform_indices = @transform_0, window_bounds = array<i64: 16, 128>}, {transform_indices = @transform_1, window_bounds = array<i64: 8, 128>}, {transform_indices = @transform_2, window_bounds = array<i64: 8, 128>}, {transform_indices = @transform_3, window_bounds = array<i64: 16, 128>}, {transform_indices = @transform_4, window_bounds = array<i64: 1, 8, 128>}]} {
    %c0 = arith.constant 0 : index
    %c0_0 = arith.constant 0 : index
    %0 = vector.load %arg1[%c0, %c0_0] : memref<16x128xf32, #tpu.memory_space<vmem>>, vector<16x128xf32>
    %c0_1 = arith.constant 0 : index
    %c0_2 = arith.constant 0 : index
    %1 = vector.load %arg2[%c0_1, %c0_2] : memref<8x128xf32, #tpu.memory_space<vmem>>, vector<8x128xf32>
    %c0_i32 = arith.constant 0 : i32
    %2 = arith.cmpi sgt, %arg0, %c0_i32 : i32
    %3 = arith.extui %2 : i1 to i32
    %4 = arith.sitofp %3 : i32 to f32
    %5 = vector.broadcast %4 : f32 to vector<8x128xf32>
    %6 = arith.mulf %1, %5 : vector<8x128xf32>
    %c0_3 = arith.constant 0 : index
    %c0_4 = arith.constant 0 : index
    %7 = vector.load %arg3[%c0_3, %c0_4] : memref<8x128xf32, #tpu.memory_space<vmem>>, vector<8x128xf32>
    %c1_i32 = arith.constant 1 : i32
    %8 = arith.cmpi slt, %arg0, %c1_i32 : i32
    %9 = arith.extui %8 : i1 to i32
    %10 = arith.sitofp %9 : i32 to f32
    %11 = vector.broadcast %10 : f32 to vector<8x128xf32>
    %12 = arith.mulf %7, %11 : vector<8x128xf32>
    %13 = tpu.concatenate %6, %0, %12 in 0 : vector<8x128xf32>, vector<16x128xf32>, vector<8x128xf32> -> vector<32x128xf32>
    %14 = tpu.iota {dimensions = array<i32: 1>} : vector<16x128xi32>
    %cst = arith.constant 0.000000e+00 : f32
    %15 = vector.broadcast %cst : f32 to vector<16x128xf32>
    %c1_i32_5 = arith.constant 1 : i32
    %16 = tpu.dynamic_rotate %13 by %c1_i32_5 dim 0 : vector<32x128xf32>, i32 -> vector<32x128xf32>
    %17 = vector.extract_strided_slice %16 {offsets = [8, 0], sizes = [16, 128], strides = [1, 1]} : vector<32x128xf32> to vector<16x128xf32>
    %18 = arith.subf %17, %0 : vector<16x128xf32>
    %19 = math.absf %18 : vector<16x128xf32>
    %cst_6 = arith.constant 0.699999988 : f32
    %20 = vector.broadcast %cst_6 : f32 to vector<16x128xf32>
    %21 = arith.mulf %20, %19 : vector<16x128xf32>
    %22 = arith.addf %15, %21 : vector<16x128xf32>
    %c127_i32 = arith.constant 127 : i32
    %23 = vector.broadcast %c127_i32 : i32 to vector<16x128xi32>
    %24 = arith.cmpi slt, %14, %23 : vector<16x128xi32>
    %c127_i32_7 = arith.constant 127 : i32
    %25 = tpu.dynamic_rotate %17 by %c127_i32_7 dim 1 : vector<16x128xf32>, i32 -> vector<16x128xf32>
    %cst_8 = arith.constant 0.000000e+00 : f32
    %26 = vector.broadcast %cst_8 : f32 to vector<16x128xf32>
    %27 = arith.select %24, %25, %26 : vector<16x128xi1>, vector<16x128xf32>
    %28 = arith.subf %27, %0 : vector<16x128xf32>
    %29 = math.absf %28 : vector<16x128xf32>
    %cst_9 = arith.constant 4.900000e-01 : f32
    %30 = vector.broadcast %cst_9 : f32 to vector<16x128xf32>
    %31 = arith.mulf %30, %29 : vector<16x128xf32>
    %32 = arith.addf %22, %31 : vector<16x128xf32>
    %c1_i32_10 = arith.constant 1 : i32
    %33 = vector.broadcast %c1_i32_10 : i32 to vector<16x128xi32>
    %34 = arith.cmpi sge, %14, %33 : vector<16x128xi32>
    %c1_i32_11 = arith.constant 1 : i32
    %35 = tpu.dynamic_rotate %0 by %c1_i32_11 dim 1 : vector<16x128xf32>, i32 -> vector<16x128xf32>
    %cst_12 = arith.constant 0.000000e+00 : f32
    %36 = vector.broadcast %cst_12 : f32 to vector<16x128xf32>
    %37 = arith.select %34, %35, %36 : vector<16x128xi1>, vector<16x128xf32>
    %38 = arith.subf %37, %0 : vector<16x128xf32>
    %39 = math.absf %38 : vector<16x128xf32>
    %c127_i32_13 = arith.constant 127 : i32
    %40 = vector.broadcast %c127_i32_13 : i32 to vector<16x128xi32>
    %41 = arith.cmpi slt, %14, %40 : vector<16x128xi32>
    %c127_i32_14 = arith.constant 127 : i32
    %42 = tpu.dynamic_rotate %0 by %c127_i32_14 dim 1 : vector<16x128xf32>, i32 -> vector<16x128xf32>
    %cst_15 = arith.constant 0.000000e+00 : f32
    %43 = vector.broadcast %cst_15 : f32 to vector<16x128xf32>
    %44 = arith.select %41, %42, %43 : vector<16x128xi1>, vector<16x128xf32>
    %45 = arith.subf %44, %0 : vector<16x128xf32>
    %46 = math.absf %45 : vector<16x128xf32>
    %47 = arith.addf %39, %46 : vector<16x128xf32>
    %cst_16 = arith.constant 0.699999988 : f32
    %48 = vector.broadcast %cst_16 : f32 to vector<16x128xf32>
    %49 = arith.mulf %48, %47 : vector<16x128xf32>
    %50 = arith.addf %32, %49 : vector<16x128xf32>
    %c31_i32 = arith.constant 31 : i32
    %51 = tpu.dynamic_rotate %13 by %c31_i32 dim 0 : vector<32x128xf32>, i32 -> vector<32x128xf32>
    %52 = vector.extract_strided_slice %51 {offsets = [8, 0], sizes = [16, 128], strides = [1, 1]} : vector<32x128xf32> to vector<16x128xf32>
    %53 = arith.subf %52, %0 : vector<16x128xf32>
    %54 = math.absf %53 : vector<16x128xf32>
    %cst_17 = arith.constant 0.699999988 : f32
    %55 = vector.broadcast %cst_17 : f32 to vector<16x128xf32>
    %56 = arith.mulf %55, %54 : vector<16x128xf32>
    %57 = arith.addf %50, %56 : vector<16x128xf32>
    %c1_i32_18 = arith.constant 1 : i32
    %58 = vector.broadcast %c1_i32_18 : i32 to vector<16x128xi32>
    %59 = arith.cmpi sge, %14, %58 : vector<16x128xi32>
    %c1_i32_19 = arith.constant 1 : i32
    %60 = tpu.dynamic_rotate %52 by %c1_i32_19 dim 1 : vector<16x128xf32>, i32 -> vector<16x128xf32>
    %cst_20 = arith.constant 0.000000e+00 : f32
    %61 = vector.broadcast %cst_20 : f32 to vector<16x128xf32>
    %62 = arith.select %59, %60, %61 : vector<16x128xi1>, vector<16x128xf32>
    %63 = arith.subf %62, %0 : vector<16x128xf32>
    %64 = math.absf %63 : vector<16x128xf32>
    %cst_21 = arith.constant 4.900000e-01 : f32
    %65 = vector.broadcast %cst_21 : f32 to vector<16x128xf32>
    %66 = arith.mulf %65, %64 : vector<16x128xf32>
    %67 = arith.addf %57, %66 : vector<16x128xf32>
    %c0_22 = arith.constant 0 : index
    %c0_23 = arith.constant 0 : index
    %68 = vector.load %arg4[%c0_22, %c0_23] : memref<16x128xf32, #tpu.memory_space<vmem>>, vector<16x128xf32>
    %69 = arith.mulf %67, %68 : vector<16x128xf32>
    %70 = vector.shape_cast %69 : vector<16x128xf32> to vector<2x8x128xf32>
    %cst_24 = arith.constant dense<0.000000e+00> : vector<8x128xf32>
    %71 = vector.multi_reduction <add>, %70, %cst_24 [0] : vector<2x8x128xf32> to vector<8x128xf32>
    %72 = vector.shape_cast %71 : vector<8x128xf32> to vector<1x8x128xf32>
    %c0_25 = arith.constant 0 : index
    %c0_26 = arith.constant 0 : index
    %c0_27 = arith.constant 0 : index
    %73 = vector.load %arg5[%c0_25, %c0_26, %c0_27] : memref<1x8x128xf32, #tpu.memory_space<vmem>>, vector<1x8x128xf32>
    tpu.vector_store %arg5[%c0_25, %c0_26, %c0_27], %72 {strides = array<i32>} : memref<1x8x128xf32, #tpu.memory_space<vmem>>, vector<1x8x128xf32>,
    return
  }
  func.func @transform_0(%arg0: i32) -> (i32, i32) {
    %c0_i32 = arith.constant 0 : i32
    %c0_i32_0 = arith.constant 0 : i32
    return %arg0, %c0_i32 : i32, i32
  }
  func.func @transform_1(%arg0: i32) -> (i32, i32) {
    %c2_i32 = arith.constant 2 : i32
    %0 = arith.muli %arg0, %c2_i32 : i32
    %c1_i32 = arith.constant 1 : i32
    %1 = arith.subi %0, %c1_i32 : i32
    %c0_i32 = arith.constant 0 : i32
    %2 = arith.maxsi %1, %c0_i32 : i32
    %c0_i32_0 = arith.constant 0 : i32
    %c0_i32_1 = arith.constant 0 : i32
    return %2, %c0_i32_0 : i32, i32
  }
  func.func @transform_2(%arg0: i32) -> (i32, i32) {
    %c1_i32 = arith.constant 1 : i32
    %0 = arith.addi %arg0, %c1_i32 : i32
    %c2_i32 = arith.constant 2 : i32
    %1 = arith.muli %0, %c2_i32 : i32
    %c3_i32 = arith.constant 3 : i32
    %2 = arith.minsi %1, %c3_i32 : i32
    %c0_i32 = arith.constant 0 : i32
    %c0_i32_0 = arith.constant 0 : i32
    return %2, %c0_i32 : i32, i32
  }
  func.func @transform_3(%arg0: i32) -> (i32, i32) {
    %c0_i32 = arith.constant 0 : i32
    %c0_i32_0 = arith.constant 0 : i32
    return %arg0, %c0_i32 : i32, i32
  }
  func.func @transform_4(%arg0: i32) -> (i32, i32, i32) {
    %c0_i32 = arith.constant 0 : i32
    %c0_i32_0 = arith.constant 0 : i32
    %c0_i32_1 = arith.constant 0 : i32
    return %arg0, %c0_i32, %c0_i32_0 : i32, i32, i32
  }
}

</mosaic_0001>

<llo_original>
// kernel: tpu_custom_call.1
$region0: #{tpu_custom_call.1}
  #allocation0 [shape = 'u32[]', space=smem, size = 0x4, offset = 0x4, fixed_abs, tag = 'smem constant byte address 0x4 - core index']
  #allocation1 [shape = 'u32[144,128]{1,0:T(1,128)}', space=vmem, size = 0x12000, scoped, tag = 'internal scratch']
  %s0 = inlined_call_operand.hbm [shape: f32[32,128], index: 0, kind: input, shape index: {}]
  %s1 = inlined_call_operand.hbm [shape: f32[32,128], index: 1, kind: input, shape index: {}]
  %s2 = inlined_call_operand.hbm [shape: f32[32,128], index: 2, kind: input, shape index: {}]
  %s3 = inlined_call_operand.hbm [shape: f32[32,128], index: 3, kind: input, shape index: {}]
  %s4 = inlined_call_operand.hbm [shape: f32[2,8,128], index: 4, kind: output, shape index: {}]
  %s5 = sld [smem:[#allocation0]]
  $region65: #{tpu_custom_call.1} parent=0
    _
  %s7 = ssub.s32 1, %s5
  %s8 = scalar_select 0, %s7, %s5
  $region1: #{tpu_custom_call.1} parent=0
    #allocation2 [shape = 'u8[16384]{0}', space=vmem, size = 0x4000, scoped, tag = 'input window, operand 0']
    #allocation3 [shape = 's32[2]{0}', space=sflag, size = 0x8, scoped, tag = 'scoped memory for tpu_custom_call.1']
    #allocation4 [shape = 's32[2]{0}', space=sflag, size = 0x8, scoped, tag = 'scoped memory for tpu_custom_call.1']
    #allocation5 [shape = 'u8[8192]{0}', space=vmem, size = 0x2000, scoped, tag = 'input window, operand 1']
    #allocation6 [shape = 's32[2]{0}', space=sflag, size = 0x8, scoped, tag = 'scoped memory for tpu_custom_call.1']
    #allocation7 [shape = 'u8[8192]{0}', space=vmem, size = 0x2000, scoped, tag = 'input window, operand 2']
    #allocation8 [shape = 'u8[16384]{0}', space=vmem, size = 0x4000, scoped, tag = 'input window, operand 3']
    #allocation9 [shape = 's32[2]{0}', space=sflag, size = 0x8, scoped, tag = 'scoped memory for tpu_custom_call.1']
    #allocation10 [shape = 'u8[8192]{0}', space=vmem, size = 0x2000, scoped, tag = 'output window, operand 0']
    %9 = vsyncpa [#allocation3], 0
    %s10 = scalar_lea.sflag [#allocation3], 1
    %11 = vsyncpa %s10, 0
    %12 = vsyncpa [#allocation6], 0
    %s13 = scalar_lea.sflag [#allocation6], 1
    %14 = vsyncpa %s13, 0
    %15 = vsyncpa [#allocation9], 0
    %s16 = scalar_lea.sflag [#allocation9], 1
    %17 = vsyncpa %s16, 0
    %18 = vsyncpa [#allocation4], 0
    %s19 = scalar_lea.sflag [#allocation4], 1
    %20 = vsyncpa %s19, 0
    loop: start=0, step=1, limit=4
    $region2: #{tpu_custom_call.1} parent=1 // loop_pre_header
      _
    $region3: #{tpu_custom_call.1} parent=1 // loop_header
      %s22 = sphi 0, %s26
      %p23 = scmp.ge.s32.totalorder %s22, 4
      %s32 = sphi 0, %s34
      %s35 = sphi 0, %s32
      %s36 = sphi 0, %s35
      %s52 = sphi 0, %s36
      %s66 = sphi 0, %s68
      %s69 = sphi 0, %s66
      %s70 = sphi 0, %s69
      %s86 = sphi 0, %s70
      %s100 = sphi 0, %s102
      %s103 = sphi 0, %s100
      %s104 = sphi 0, %s103
      %s120 = sphi 0, %s104
      %s126 = sphi 0, %s128
      %s129 = sphi 0, %s126
      %s130 = sphi 0, %s129
      %s146 = sphi 0, %s130
      %s152 = sphi 0, %s154
      %s155 = sphi 0, %s152
      %s156 = sphi 0, %s155
      %s172 = sphi 0, %s156
    $region4: #{tpu_custom_call.1} parent=1 // loop_header_branch
      %25 = sbr.rel (%p23) target = $region8
    $region5: #{tpu_custom_call.1} parent=1 // loop_body
      %s27 = ssub.s32 %s22, 1
      %s28 = ssub.s32 %s22, 2
      %s29 = sadd.s32 %s22, 1
      %s30 = ssub.s32 %s22, %s29
      %p31 = scmp.eq.s32.totalorder %s30, 0
      %s33 = sadd.s32 %s32, 1
      %s34 = scalar_select %p31, %s32, %s33
      %p37 = pneg %p31
      %p38 = scmp.eq.s32.totalorder %s22, 1
      %p39 = por %p37, %p38
      %p40 = scmp.ne.s32.totalorder %s32, %s35
      %p41 = scmp.eq.s32.totalorder %s22, 0
      %p42 = por %p40, %p41
      %p43 = scmp.ne.s32.totalorder %s32, %s35
      %p44 = scmp.eq.s32.totalorder %s27, 1
      %p45 = por %p43, %p44
      %p46 = scmp.ne.s32.totalorder %s35, %s36
      %p47 = scmp.eq.s32.totalorder %s27, 0
      %p48 = por %p46, %p47
      %p49 = scmp.ne.s32.totalorder %s35, %s36
      %p50 = scmp.eq.s32.totalorder %s28, 1
      %p51 = por %p49, %p50
      %p53 = scmp.ne.s32.totalorder %s36, %s52
      %p54 = scmp.eq.s32.totalorder %s28, 0
      %p55 = por %p53, %p54
      %s56 = smul.u32 %s22, 2
      %s57 = ssub.s32 %s56, 1
      %p58 = scmp.gt.s32.totalorder %s57, 0
      %s59 = scalar_select %p58, %s57, 0
      %s60 = smul.u32 %s29, 2
      %s61 = ssub.s32 %s60, 1
      %p62 = scmp.gt.s32.totalorder %s61, 0
      %s63 = scalar_select %p62, %s61, 0
      %s64 = ssub.s32 %s59, %s63
      %p65 = scmp.eq.s32.totalorder %s64, 0
      %s67 = sadd.s32 %s66, 1
      %s68 = scalar_select %p65, %s66, %s67
      %p71 = pneg %p65
      %p72 = scmp.eq.s32.totalorder %s22, 1
      %p73 = por %p71, %p72
      %p74 = scmp.ne.s32.totalorder %s66, %s69
      %p75 = scmp.eq.s32.totalorder %s22, 0
      %p76 = por %p74, %p75
      %p77 = scmp.ne.s32.totalorder %s66, %s69
      %p78 = scmp.eq.s32.totalorder %s27, 1
      %p79 = por %p77, %p78
      %p80 = scmp.ne.s32.totalorder %s69, %s70
      %p81 = scmp.eq.s32.totalorder %s27, 0
      %p82 = por %p80, %p81
      %p83 = scmp.ne.s32.totalorder %s69, %s70
      %p84 = scmp.eq.s32.totalorder %s28, 1
      %p85 = por %p83, %p84
      %p87 = scmp.ne.s32.totalorder %s70, %s86
      %p88 = scmp.eq.s32.totalorder %s28, 0
      %p89 = por %p87, %p88
      %s90 = sadd.s32 %s22, 1
      %s91 = smul.u32 %s90, 2
      %p92 = scmp.lt.s32.totalorder %s91, 3
      %s93 = scalar_select %p92, %s91, 3
      %s94 = sadd.s32 %s29, 1
      %s95 = smul.u32 %s94, 2
      %p96 = scmp.lt.s32.totalorder %s95, 3
      %s97 = scalar_select %p96, %s95, 3
      %s98 = ssub.s32 %s93, %s97
      %p99 = scmp.eq.s32.totalorder %s98, 0
      %s101 = sadd.s32 %s100, 1
      %s102 = scalar_select %p99, %s100, %s101
      %p105 = pneg %p99
      %p106 = scmp.eq.s32.totalorder %s22, 1
      %p107 = por %p105, %p106
      %p108 = scmp.ne.s32.totalorder %s100, %s103
      %p109 = scmp.eq.s32.totalorder %s22, 0
      %p110 = por %p108, %p109
      %p111 = scmp.ne.s32.totalorder %s100, %s103
      %p112 = scmp.eq.s32.totalorder %s27, 1
      %p113 = por %p111, %p112
      %p114 = scmp.ne.s32.totalorder %s103, %s104
      %p115 = scmp.eq.s32.totalorder %s27, 0
      %p116 = por %p114, %p115
      %p117 = scmp.ne.s32.totalorder %s103, %s104
      %p118 = scmp.eq.s32.totalorder %s28, 1
      %p119 = por %p117, %p118
      %p121 = scmp.ne.s32.totalorder %s104, %s120
      %p122 = scmp.eq.s32.totalorder %s28, 0
      %p123 = por %p121, %p122
      %s124 = ssub.s32 %s22, %s29
      %p125 = scmp.eq.s32.totalorder %s124, 0
      %s127 = sadd.s32 %s126, 1
      %s128 = scalar_select %p125, %s126, %s127
      %p131 = pneg %p125
      %p132 = scmp.eq.s32.totalorder %s22, 1
      %p133 = por %p131, %p132
      %p134 = scmp.ne.s32.totalorder %s126, %s129
      %p135 = scmp.eq.s32.totalorder %s22, 0
      %p136 = por %p134, %p135
      %p137 = scmp.ne.s32.totalorder %s126, %s129
      %p138 = scmp.eq.s32.totalorder %s27, 1
      %p139 = por %p137, %p138
      %p140 = scmp.ne.s32.totalorder %s129, %s130
      %p141 = scmp.eq.s32.totalorder %s27, 0
      %p142 = por %p140, %p141
      %p143 = scmp.ne.s32.totalorder %s129, %s130
      %p144 = scmp.eq.s32.totalorder %s28, 1
      %p145 = por %p143, %p144
      %p147 = scmp.ne.s32.totalorder %s130, %s146
      %p148 = scmp.eq.s32.totalorder %s28, 0
      %p149 = por %p147, %p148
      %s150 = ssub.s32 %s22, %s29
      %p151 = scmp.eq.s32.totalorder %s150, 0
      %s153 = sadd.s32 %s152, 1
      %s154 = scalar_select %p151, %s152, %s153
      %p157 = pneg %p151
      %p158 = scmp.eq.s32.totalorder %s22, 1
      %p159 = por %p157, %p158
      %p160 = scmp.ne.s32.totalorder %s152, %s155
      %p161 = scmp.eq.s32.totalorder %s22, 0
      %p162 = por %p160, %p161
      %p163 = scmp.ne.s32.totalorder %s152, %s155
      %p164 = scmp.eq.s32.totalorder %s27, 1
      %p165 = por %p163, %p164
      %p166 = scmp.ne.s32.totalorder %s155, %s156
      %p167 = scmp.eq.s32.totalorder %s27, 0
      %p168 = por %p166, %p167
      %p169 = scmp.ne.s32.totalorder %s155, %s156
      %p170 = scmp.eq.s32.totalorder %s28, 1
      %p171 = por %p169, %p170
      %p173 = scmp.ne.s32.totalorder %s156, %s172
      %p174 = scmp.eq.s32.totalorder %s28, 0
      %p175 = por %p173, %p174
      %p176 = scmp.le.s32.totalorder 1, %s22
      %p177 = scmp.lt.s32.totalorder %s22, 3
      %p178 = pnand %p176, %p177
      %p179 = pneg %p178
      // Predicated region
      $region9: #{tpu_custom_call.1} parent=5 // pred_check
        _
      $region10: #{tpu_custom_call.1} parent=5 // pred_check_branch
        %181 = sbr.rel (%p178) target = $region12
      $region11: #{tpu_custom_call.1} parent=5 // pred_region
        %s182 = ssub.s32 %s22, 1
      $region12: #{tpu_custom_call.1} parent=5 // pred_fallthru
        _
      %p183 = scmp.lt.s32.totalorder %s22, 2
      // Predicated region
      $region13: #{tpu_custom_call.1} parent=5 // pred_check
        %p184 = pneg %p183
      $region14: #{tpu_custom_call.1} parent=5 // pred_check_branch
        %186 = sbr.rel (%p184) target = $region16
      $region15: #{tpu_custom_call.1} parent=5 // pred_region
        // Predicated region
        $region17: #{tpu_custom_call.1} parent=15 // pred_check
          %p187 = pneg %p42
        $region18: #{tpu_custom_call.1} parent=15 // pred_check_branch
          %189 = sbr.rel (%p187) target = $region20
        $region19: #{tpu_custom_call.1} parent=15 // pred_region
          %s190 = sand.u32 %s32, 1
          %s191 = scalar_lea.sflag [#allocation3], %s190
          %s192 = sand.u32 %s32, 1
          %s193 = smul.addr %s192, 16
          %s194 = scalar_lea.vmem [#allocation2], %s193
          %s195 = smul.u32 2, %s22
          %s197 = ssub.s32 256, 256
          %198 = vsyncadd %s191, %s197
          %s199 = smul.addr %s195, 128
          %s200 = scalar_lea.hbm %s0, %s199
          %s201 = sshll.u32 %s194, 4
          %s202 = int_to_ptr.vmem [resolvable:$true] %s201
          %207 = dma.hbm_to_vmem [thread:$0]  %s200, 256, %s202, %s191, 128, 128, 8
        $region20: #{tpu_custom_call.1} parent=15 // pred_fallthru
          _
        // Predicated region
        $region21: #{tpu_custom_call.1} parent=15 // pred_check
          %p208 = pneg %p76
        $region22: #{tpu_custom_call.1} parent=15 // pred_check_branch
          %210 = sbr.rel (%p208) target = $region24
        $region23: #{tpu_custom_call.1} parent=15 // pred_region
          %s211 = sand.u32 %s22, 1
          %s212 = scalar_lea.sflag [#allocation6], %s211
          %s213 = sand.u32 %s66, 1
          %s214 = smul.addr %s213, 8
          %s215 = scalar_lea.vmem [#allocation5], %s214
          %s216 = smul.u32 %s22, 2
          %s217 = ssub.s32 %s216, 1
          %p218 = scmp.gt.s32.totalorder %s217, 0
          %s219 = scalar_select %p218, %s217, 0
          %s221 = ssub.s32 128, 128
          %222 = vsyncadd %s212, %s221
          %s223 = smul.addr %s219, 128
          %s224 = scalar_lea.hbm %s1, %s223
          %s226 = sshll.u32 %s215, 4
          %s227 = int_to_ptr.vmem [resolvable:$true] %s226
          %229 = dma.hbm_to_vmem [thread:$0]  %s224, 128, %s227, %s212
        $region24: #{tpu_custom_call.1} parent=15 // pred_fallthru
          _
        // Predicated region
        $region25: #{tpu_custom_call.1} parent=15 // pred_check
          %p230 = pneg %p110
        $region26: #{tpu_custom_call.1} parent=15 // pred_check_branch
          %232 = sbr.rel (%p230) target = $region28
        $region27: #{tpu_custom_call.1} parent=15 // pred_region
          %s233 = sand.u32 %s22, 1
          %s234 = scalar_lea.sflag [#allocation6], %s233
          %s235 = sand.u32 %s100, 1
          %s236 = smul.addr %s235, 8
          %s237 = scalar_lea.vmem [#allocation7], %s236
          %s238 = sadd.s32 %s22, 1
          %s239 = smul.u32 %s238, 2
          %p240 = scmp.lt.s32.totalorder %s239, 3
          %s241 = scalar_select %p240, %s239, 3
          %s243 = ssub.s32 128, 128
          %244 = vsyncadd %s234, %s243
          %s245 = smul.addr %s241, 128
          %s246 = scalar_lea.hbm %s2, %s245
          %s248 = sshll.u32 %s237, 4
          %s249 = int_to_ptr.vmem [resolvable:$true] %s248
          %251 = dma.hbm_to_vmem [thread:$0]  %s246, 128, %s249, %s234
        $region28: #{tpu_custom_call.1} parent=15 // pred_fallthru
          _
        // Predicated region
        $region29: #{tpu_custom_call.1} parent=15 // pred_check
          %p252 = pneg %p136
        $region30: #{tpu_custom_call.1} parent=15 // pred_check_branch
          %254 = sbr.rel (%p252) target = $region32
        $region31: #{tpu_custom_call.1} parent=15 // pred_region
          %s255 = sand.u32 %s126, 1
          %s256 = scalar_lea.sflag [#allocation9], %s255
          %s257 = sand.u32 %s126, 1
          %s258 = smul.addr %s257, 16
          %s259 = scalar_lea.vmem [#allocation8], %s258
          %s260 = smul.u32 2, %s22
          %s262 = ssub.s32 256, 256
          %263 = vsyncadd %s256, %s262
          %s264 = smul.addr %s260, 128
          %s265 = scalar_lea.hbm %s3, %s264
          %s266 = sshll.u32 %s259, 4
          %s267 = int_to_ptr.vmem [resolvable:$true] %s266
          %272 = dma.hbm_to_vmem [thread:$0]  %s265, 256, %s267, %s256, 128, 128, 8
        $region32: #{tpu_custom_call.1} parent=15 // pred_fallthru
          _
      $region16: #{tpu_custom_call.1} parent=5 // pred_fallthru
        _
      %p273 = scmp.le.s32.totalorder 1, %s22
      %p274 = scmp.lt.s32.totalorder %s22, 3
      %p275 = pnand %p273, %p274
      %p276 = pneg %p275
      // Predicated region
      $region33: #{tpu_custom_call.1} parent=5 // pred_check
        _
      $region34: #{tpu_custom_call.1} parent=5 // pred_check_branch
        %278 = sbr.rel (%p275) target = $region36
      $region35: #{tpu_custom_call.1} parent=5 // pred_region
        %s279 = ssub.s32 %s22, 1
        %s280 = sand.u32 %s35, 1
        %s281 = scalar_lea.sflag [#allocation3], %s280
        %s282 = sand.u32 %s35, 1
        %s283 = smul.addr %s282, 16
        %s284 = scalar_lea.vmem [#allocation2], %s283
        // Predicated region
        $region37: #{tpu_custom_call.1} parent=35 // pred_check
          %p285 = pneg %p48
        $region38: #{tpu_custom_call.1} parent=35 // pred_check_branch
          %287 = sbr.rel (%p285) target = $region40
        $region39: #{tpu_custom_call.1} parent=35 // pred_region
          %288 = dma.done %s281, 256
        $region40: #{tpu_custom_call.1} parent=35 // pred_fallthru
          _
        %s289 = sand.u32 %s27, 1
        %s290 = scalar_lea.sflag [#allocation6], %s289
        %s291 = sand.u32 %s69, 1
        %s292 = smul.addr %s291, 8
        %s293 = scalar_lea.vmem [#allocation5], %s292
        // Predicated region
        $region41: #{tpu_custom_call.1} parent=35 // pred_check
          %p294 = pneg %p82
        $region42: #{tpu_custom_call.1} parent=35 // pred_check_branch
          %296 = sbr.rel (%p294) target = $region44
        $region43: #{tpu_custom_call.1} parent=35 // pred_region
          %297 = dma.done %s290, 128
        $region44: #{tpu_custom_call.1} parent=35 // pred_fallthru
          _
        %s298 = sand.u32 %s27, 1
        %s299 = scalar_lea.sflag [#allocation6], %s298
        %s300 = sand.u32 %s103, 1
        %s301 = smul.addr %s300, 8
        %s302 = scalar_lea.vmem [#allocation7], %s301
        // Predicated region
        $region45: #{tpu_custom_call.1} parent=35 // pred_check
          %p303 = pneg %p116
        $region46: #{tpu_custom_call.1} parent=35 // pred_check_branch
          %305 = sbr.rel (%p303) target = $region48
        $region47: #{tpu_custom_call.1} parent=35 // pred_region
          %306 = dma.done %s299, 128
        $region48: #{tpu_custom_call.1} parent=35 // pred_fallthru
          _
        %s307 = sand.u32 %s129, 1
        %s308 = scalar_lea.sflag [#allocation9], %s307
        %s309 = sand.u32 %s129, 1
        %s310 = smul.addr %s309, 16
        %s311 = scalar_lea.vmem [#allocation8], %s310
        // Predicated region
        $region49: #{tpu_custom_call.1} parent=35 // pred_check
          %p312 = pneg %p142
        $region50: #{tpu_custom_call.1} parent=35 // pred_check_branch
          %314 = sbr.rel (%p312) target = $region52
        $region51: #{tpu_custom_call.1} parent=35 // pred_region
          %315 = dma.done %s308, 256
        $region52: #{tpu_custom_call.1} parent=35 // pred_fallthru
          _
        %s316 = sand.u32 %s35, 1
        %s317 = scalar_lea.sflag [#allocation3], %s316
        %s318 = sand.u32 %s35, 1
        %s319 = smul.addr %s318, 16
        %s320 = scalar_lea.vmem [#allocation2], %s319
        %p321 = pneg %p48
        %p322 = pneg %p45
        %s323 = sand.u32 %s27, 1
        %s324 = scalar_lea.sflag [#allocation6], %s323
        %s325 = sand.u32 %s69, 1
        %s326 = smul.addr %s325, 8
        %s327 = scalar_lea.vmem [#allocation5], %s326
        %p328 = pneg %p82
        %p329 = pneg %p79
        %s330 = sand.u32 %s27, 1
        %s331 = scalar_lea.sflag [#allocation6], %s330
        %s332 = sand.u32 %s103, 1
        %s333 = smul.addr %s332, 8
        %s334 = scalar_lea.vmem [#allocation7], %s333
        %p335 = pneg %p116
        %p336 = pneg %p113
        %s337 = sand.u32 %s129, 1
        %s338 = scalar_lea.sflag [#allocation9], %s337
        %s339 = sand.u32 %s129, 1
        %s340 = smul.addr %s339, 16
        %s341 = scalar_lea.vmem [#allocation8], %s340
        %p342 = pneg %p142
        %p343 = pneg %p139
        %p344 = pneg %p168
        %p345 = pneg %p165
        %s346 = sand.u32 %s155, 1
        %s347 = scalar_lea.sflag [#allocation4], %s346
        %s348 = sand.u32 %s155, 1
        %s349 = smul.addr %s348, 8
        %s350 = scalar_lea.vmem [#allocation10], %s349
        %s351 = smul.u32 2, %s27
        %s352 = smul.u32 %s27, 2
        %s353 = ssub.s32 %s352, 1
        %p354 = scmp.gt.s32.totalorder %s353, 0
        %s355 = scalar_select %p354, %s353, 0
        %s356 = sadd.s32 %s27, 1
        %s357 = smul.u32 %s356, 2
        %p358 = scmp.lt.s32.totalorder %s357, 3
        %s359 = scalar_select %p358, %s357, 3
        %s360 = smul.u32 2, %s27
        %v361 = vld [vmem:[%s284] sm:$0xff]
        %v362 = vld [vmem:[%s284 + $0x8] sm:$0xff]
        %v363 = vld [vmem:[%s293] sm:$0xff]
        %p364 = scmp.gt.s32.totalorder %s27, 0
        %s365 = scalar_select %p364, 1, 0
        %s366 = scvt.s32.f32 %s365
        %v367 = vstv %s366
        %v368 = vmul.f32 %v363, %v367
        %v369 = vld [vmem:[%s302] sm:$0xff]
        %p370 = scmp.lt.s32.totalorder %s27, 1
        %s371 = scalar_select %p370, 1, 0
        %s372 = scvt.s32.f32 %s371
        %v373 = vstv %s372
        %v374 = vmul.f32 %v369, %v373
        %v375 = vlaneseq
        %v376 = vand.u32 %v375, 127
        %v377 = vrot.slane %v368, 7
        %v378 = vrot.slane %v361, 7
        %v379 = vrot.slane %v362, 7
        %v380 = vlaneseq
        %v381 = vshrl.u32 %v380, 7
        %vm382 = vcmp.lt.s32.totalorder %v381, 1
        %v383 = vsel %vm382, %v378, %v379
        %v384 = vsel %vm382, %v377, %v378
        %v385 = vsub.f32 %v384, %v361
        %v386 = vsub.f32 %v383, %v362
        %v387 = vand.u32 2147483647, %v385
        %v388 = vand.u32 2147483647, %v386
        %v389 = vmul.f32 %v387, 0.7
        %v390 = vmul.f32 %v388, 0.7
        %v391 = vadd.f32 %v389, 0.0
        %v392 = vadd.f32 %v390, 0.0
        %vm393 = vcmp.lt.s32.totalorder %v376, 127
        %394 = vrot.lane.b32.xlu0 %v384, 127
        %v395 = vpop.permute.xlu0 %394
        %396 = vrot.lane.b32.xlu0 %v383, 127
        %v397 = vpop.permute.xlu0 %396
        %v398 = vsel %vm393, %v395, 0.0
        %v399 = vsel %vm393, %v397, 0.0
        %v400 = vsub.f32 %v398, %v361
        %v401 = vsub.f32 %v399, %v362
        %v402 = vand.u32 2147483647, %v400
        %v403 = vand.u32 2147483647, %v401
        %v404 = vmul.f32 %v402, 0.49
        %v405 = vmul.f32 %v403, 0.49
        %v406 = vadd.f32 %v391, %v404
        %v407 = vadd.f32 %v392, %v405
        %vm408 = vcmp.ge.s32.totalorder %v376, 1
        %409 = vrot.lane.b32.xlu0 %v361, 1
        %v410 = vpop.permute.xlu0 %409
        %411 = vrot.lane.b32.xlu0 %v362, 1
        %v412 = vpop.permute.xlu0 %411
        %v413 = vsel %vm408, %v410, 0.0
        %v414 = vsel %vm408, %v412, 0.0
        %v415 = vsub.f32 %v413, %v361
        %v416 = vsub.f32 %v414, %v362
        %v417 = vand.u32 2147483647, %v415
        %v418 = vand.u32 2147483647, %v416
        %419 = vrot.lane.b32.xlu0 %v361, 127
        %v420 = vpop.permute.xlu0 %419
        %421 = vrot.lane.b32.xlu0 %v362, 127
        %v422 = vpop.permute.xlu0 %421
        %v423 = vsel %vm393, %v420, 0.0
        %v424 = vsel %vm393, %v422, 0.0
        %v425 = vsub.f32 %v423, %v361
        %v426 = vsub.f32 %v424, %v362
        %v427 = vand.u32 2147483647, %v425
        %v428 = vand.u32 2147483647, %v426
        %v429 = vadd.f32 %v417, %v427
        %v430 = vadd.f32 %v418, %v428
        %v431 = vmul.f32 %v429, 0.7
        %v432 = vmul.f32 %v430, 0.7
        %v433 = vadd.f32 %v406, %v431
        %v434 = vadd.f32 %v407, %v432
        %v435 = vrot.slane %v361, 1
        %v436 = vrot.slane %v362, 1
        %v437 = vrot.slane %v374, 1
        %vm438 = vcmp.lt.s32.totalorder %v381, 7
        %v439 = vsel %vm438, %v436, %v437
        %v440 = vsel %vm438, %v435, %v436
        %v441 = vsub.f32 %v440, %v361
        %v442 = vsub.f32 %v439, %v362
        %v443 = vand.u32 2147483647, %v441
        %v444 = vand.u32 2147483647, %v442
        %v445 = vmul.f32 %v443, 0.7
        %v446 = vmul.f32 %v444, 0.7
        %v447 = vadd.f32 %v433, %v445
        %v448 = vadd.f32 %v434, %v446
        %449 = vrot.lane.b32.xlu0 %v440, 1
        %v450 = vpop.permute.xlu0 %449
        %451 = vrot.lane.b32.xlu0 %v439, 1
        %v452 = vpop.permute.xlu0 %451
        %v453 = vsel %vm408, %v450, 0.0
        %v454 = vsel %vm408, %v452, 0.0
        %v455 = vsub.f32 %v453, %v361
        %v456 = vsub.f32 %v454, %v362
        %v457 = vand.u32 2147483647, %v455
        %v458 = vand.u32 2147483647, %v456
        %v459 = vmul.f32 %v457, 0.49
        %v460 = vmul.f32 %v458, 0.49
        %v461 = vadd.f32 %v447, %v459
        %v462 = vadd.f32 %v448, %v460
        %v463 = vld [vmem:[%s311] sm:$0xff]
        %v464 = vld [vmem:[%s311 + $0x8] sm:$0xff]
        %v465 = vmul.f32 %v461, %v463
        %v466 = vmul.f32 %v462, %v464
        %v467 = vadd.f32 %v465, %v466
        %468 = vst [vmem:[%s350] sm:$0xff] %v467
        %s469 = sand.u32 %s155, 1
        %s470 = scalar_lea.sflag [#allocation4], %s469
        %s471 = sand.u32 %s155, 1
        %s472 = smul.addr %s471, 8
        %s473 = scalar_lea.vmem [#allocation10], %s472
        // Predicated region
        $region53: #{tpu_custom_call.1} parent=35 // pred_check
          %p474 = pneg %p165
        $region54: #{tpu_custom_call.1} parent=35 // pred_check_branch
          %476 = sbr.rel (%p474) target = $region56
        $region55: #{tpu_custom_call.1} parent=35 // pred_region
          %s478 = ssub.s32 128, 128
          %479 = vsyncadd %s470, %s478
          %s480 = smul.addr %s27, 128
          %s481 = scalar_lea.hbm %s4, %s480
          %s483 = sshll.u32 %s473, 4
          %s484 = int_to_ptr.vmem [resolvable:$true] %s483
          %486 = dma.vmem_to_hbm [thread:$0]  %s484, 128, %s481, %s470
        $region56: #{tpu_custom_call.1} parent=35 // pred_fallthru
          _
      $region36: #{tpu_custom_call.1} parent=5 // pred_fallthru
        _
      %p487 = scmp.le.s32.totalorder 2, %s22
      // Predicated region
      $region57: #{tpu_custom_call.1} parent=5 // pred_check
        %p488 = pneg %p487
      $region58: #{tpu_custom_call.1} parent=5 // pred_check_branch
        %490 = sbr.rel (%p488) target = $region60
      $region59: #{tpu_custom_call.1} parent=5 // pred_region
        %s491 = ssub.s32 %s22, 2
        // Predicated region
        $region61: #{tpu_custom_call.1} parent=59 // pred_check
          %p492 = pneg %p171
        $region62: #{tpu_custom_call.1} parent=59 // pred_check_branch
          %494 = sbr.rel (%p492) target = $region64
        $region63: #{tpu_custom_call.1} parent=59 // pred_region
          %s495 = sand.u32 %s156, 1
          %s496 = scalar_lea.sflag [#allocation4], %s495
          %s497 = sand.u32 %s156, 1
          %s498 = smul.addr %s497, 8
          %s499 = scalar_lea.vmem [#allocation10], %s498
          %500 = dma.done %s496, 128
        $region64: #{tpu_custom_call.1} parent=59 // pred_fallthru
          _
      $region60: #{tpu_custom_call.1} parent=5 // pred_fallthru
        _
    $region6: #{tpu_custom_call.1} parent=1 // loop_footer
      %s26 = sadd.s32 1, %s22
    $region7: #{tpu_custom_call.1} parent=1 // loop_footer_branch
      %21 = sbr.rel target = $region3
    $region8: #{tpu_custom_call.1} parent=1 // loop_exit
      _
    %501 = vsyncpa [#allocation3], 1
    %s502 = scalar_lea.sflag [#allocation3], 1
    %503 = vsyncpa %s502, 1
    %504 = vsyncpa [#allocation6], 1
    %s505 = scalar_lea.sflag [#allocation6], 1
    %506 = vsyncpa %s505, 1
    %507 = vsyncpa [#allocation9], 1
    %s508 = scalar_lea.sflag [#allocation9], 1
    %509 = vsyncpa %s508, 1
    %510 = vsyncpa [#allocation4], 1
    %s511 = scalar_lea.sflag [#allocation4], 1
    %512 = vsyncpa %s511, 1

</llo_original>
